<compile_context>
chip_gen: v7x
topology: tpu7x:2x2x1
jax: 0.10.0
libtpu: 0.0.40
codegen_flags: <defaults>
</compile_context>

<pallas_src>
import math
import jax
import jax.numpy as jnp
from jax.experimental import pallas as pl
from jax.experimental.pallas import tpu as pltpu

LN_EPS = 1e-5  # PyTorch nn.LayerNorm default


def _round_up(x, m):
    return ((x + m - 1) // m) * m


def _ffn_kernel(x_ref, w1_ref, b1_ref, w2_ref, b2_ref, g_ref, beta_ref,
                o_ref, acc_ref):
    # grid = (token tiles, intermediate-dim tiles); the k axis is a reduction.
    k = pl.program_id(1)
    nk = pl.num_programs(1)

    @pl.when(k == 0)
    def _():
        acc_ref[...] = jnp.zeros_like(acc_ref)

    # fc1 chunk (bf16 MXU matmul, f32 accumulate) + exact erf GELU in f32
    x_bf = x_ref[...].astype(jnp.bfloat16)
    h = jnp.dot(x_bf, w1_ref[...], preferred_element_type=jnp.float32) + b1_ref[...]
    h = 0.5 * h * (1.0 + jax.lax.erf(h * (1.0 / math.sqrt(2.0))))

    # fc2 chunk, accumulated into the resident f32 scratch
    acc_ref[...] += jnp.dot(h.astype(jnp.bfloat16), w2_ref[...],
                            preferred_element_type=jnp.float32)

    @pl.when(k == nk - 1)
    def _():
        # TODO(synk): dropout omitted (eval-mode identity); training-mode dropout
        # would need pltpu.prng_seed / pltpu.prng_random_bits.
        x_f32 = x_ref[...].astype(jnp.float32)
        z = acc_ref[...] + b2_ref[...] + x_f32          # fc2 bias + residual
        mean = jnp.mean(z, axis=-1, keepdims=True)
        var = jnp.mean((z - mean) ** 2, axis=-1, keepdims=True)
        zn = (z - mean) * jax.lax.rsqrt(var + LN_EPS)
        o_ref[...] = (zn * g_ref[...] + beta_ref[...]).astype(o_ref.dtype)


def feed_forward(x, w1, b1, w2, b2, gamma, beta, *, tm=256,
                 weight_vmem_budget=24 << 20):
    """x: [M, H] float32.  w1: [H, I], b1: [I], w2: [I, H], b2/gamma/beta: [H]."""
    M, H = x.shape
    I = w1.shape[1]

    # --- token tile: large enough to feed the MXU, but never larger than M
    #     (rounded up to the sublane multiple of 8).
    tm_eff = min(tm, _round_up(M, 8))
    M_pad = _round_up(M, tm_eff)

    # --- intermediate-dim tile: keep full weights resident if they fit the
    #     budget (bf16), otherwise stream (H, tI)/(tI, H) tiles on a reduction
    #     grid axis (needed at v7x-scale VMEM).
    full_w_bytes = 2 * H * I * 2  # both weights, bf16
    if full_w_bytes <= weight_vmem_budget:
        ti = I
    else:
        ti = max(128, (weight_vmem_budget // (4 * H)) // 128 * 128)
        ti = min(ti, I)
    I_pad = _round_up(I, ti)
    nk = I_pad // ti

    # --- bf16 weights (halves VMEM / HBM traffic); params stay f32.
    w1_bf = w1.astype(jnp.bfloat16)
    w2_bf = w2.astype(jnp.bfloat16)
    b1_f = b1.astype(jnp.float32)

    # --- zero padding is exact: extra token rows are sliced off, and padded
    #     intermediate columns give gelu(0)=0 contributions through zero w2 rows.
    if M_pad != M:
        x_in = jnp.pad(x, ((0, M_pad - M), (0, 0)))
    else:
        x_in = x
    if I_pad != I:
        w1_bf = jnp.pad(w1_bf, ((0, 0), (0, I_pad - I)))
        w2_bf = jnp.pad(w2_bf, ((0, I_pad - I), (0, 0)))
        b1_f = jnp.pad(b1_f, ((0, I_pad - I),))

    b1_2d = b1_f.reshape(1, I_pad)
    b2_2d = b2.astype(jnp.float32).reshape(1, H)
    g_2d = gamma.astype(jnp.float32).reshape(1, H)
    beta_2d = beta.astype(jnp.float32).reshape(1, H)

    # --- weight BlockSpecs: when the block index never changes (nk == 1),
    #     single-buffer them instead of the default double-buffering.
    buffered_cls = getattr(pl, "Buffered", None)

    def _w_spec(shape, index_map):
        if nk == 1 and buffered_cls is not None:
            try:
                return pl.BlockSpec(shape, index_map,
                                    pipeline_mode=buffered_cls(1))
            except TypeError:  # older JAX without pipeline_mode kwarg
                pass
        return pl.BlockSpec(shape, index_map)

    # --- explicit scoped-VMEM limit sized to the working set (with headroom).
    n_wbuf = 1 if nk == 1 else 2
    est = (n_wbuf * 2 * (H * ti) * 2          # bf16 weight tiles
           + 2 * tm_eff * H * 4               # x tiles (f32, double-buffered)
           + 2 * tm_eff * H * 4               # out tiles (f32, double-buffered)
           + tm_eff * H * 4                   # f32 accumulator scratch
           + 2 * (I_pad + 3 * H) * 4)         # biases / gamma / beta
    vmem_limit = min(64 << 20, max(32 << 20, int(est * 1.25) + (2 << 20)))

    grid = (M_pad // tm_eff, nk)

    out = pl.pallas_call(
        _ffn_kernel,
        out_shape=jax.ShapeDtypeStruct((M_pad, H), x.dtype),
        grid_spec=pltpu.PrefetchScalarGridSpec(
            num_scalar_prefetch=0,
            grid=grid,
            in_specs=[
                pl.BlockSpec((tm_eff, H), lambda i, k: (i, 0)),   # x tile (resident over k)
                _w_spec((H, ti), lambda i, k: (0, k)),            # w1 tile
                pl.BlockSpec((1, ti), lambda i, k: (0, k)),       # b1 tile
                _w_spec((ti, H), lambda i, k: (k, 0)),            # w2 tile
                pl.BlockSpec((1, H), lambda i, k: (0, 0)),        # b2
                pl.BlockSpec((1, H), lambda i, k: (0, 0)),        # gamma
                pl.BlockSpec((1, H), lambda i, k: (0, 0)),        # beta
            ],
            out_specs=pl.BlockSpec((tm_eff, H), lambda i, k: (i, 0)),
            scratch_shapes=[pltpu.VMEM((tm_eff, H), jnp.float32)],
        ),
        compiler_params=pltpu.CompilerParams(
            dimension_semantics=("parallel", "arbitrary"),
            vmem_limit_bytes=vmem_limit,
        ),
    )(x_in, w1_bf, b1_2d, w2_bf, b2_2d, g_2d, beta_2d)

    return out[:M] if M_pad != M else out


def _reference(x, w1, b1, w2, b2, gamma, beta):
    h = x @ w1 + b1
    h = 0.5 * h * (1.0 + jax.lax.erf(h / math.sqrt(2.0)))
    y = h @ w2 + b2
    z = y + x
    mean = jnp.mean(z, axis=-1, keepdims=True)
    var = jnp.mean((z - mean) ** 2, axis=-1, keepdims=True)
    return (z - mean) * jax.lax.rsqrt(var + LN_EPS) * gamma + beta


if __name__ == "__main__":
    hidden_size, intermediate_size = 128, 256

    key = jax.random.PRNGKey(0)
    kx, k1, k2, k3, k4 = jax.random.split(key, 5)

    # deterministic synthetic parameters (Linear-like fan_in scaling)
    w1 = jax.random.normal(k1, (hidden_size, intermediate_size), jnp.float32) / math.sqrt(hidden_size)
    b1 = jax.random.normal(k2, (intermediate_size,), jnp.float32) * 0.02
    w2 = jax.random.normal(k3, (intermediate_size, hidden_size), jnp.float32) / math.sqrt(intermediate_size)
    b2 = jax.random.normal(k4, (hidden_size,), jnp.float32) * 0.02
    gamma = jnp.ones((hidden_size,), jnp.float32)
    beta = jnp.zeros((hidden_size,), jnp.float32)

    # (2, 8): tile-aligned path.  (3, 7): exercises the round-up/padding path.
    for batch, seq in [(2, 8), (3, 7)]:
        x = jax.random.normal(kx, (batch, seq, hidden_size), dtype=jnp.float32)
        x2d = x.reshape(batch * seq, hidden_size)

        out = feed_forward(x2d, w1, b1, w2, b2, gamma, beta)
        out = jax.block_until_ready(out)

        ref = _reference(x2d, w1, b1, w2, b2, gamma, beta)
        assert out.shape == x2d.shape
        # bf16 matmuls (f32 accumulation) vs. pure-f32 reference -> loose tolerance
        assert jnp.allclose(out, ref, atol=3e-2, rtol=3e-2), "mismatch vs pure-JAX reference"

    print("KERNEL_OK")
</pallas_src>

<mosaic_0001>
module attributes {stable_mosaic.version = 11 : i64} {
  func.func @_ffn_kernel(%arg0: i32, %arg1: i32, %arg2: memref<16x128xf32, #tpu.memory_space<vmem>>, %arg3: memref<128x256xbf16, #tpu.memory_space<vmem>>, %arg4: memref<1x256xf32, #tpu.memory_space<vmem>>, %arg5: memref<256x128xbf16, #tpu.memory_space<vmem>>, %arg6: memref<1x128xf32, #tpu.memory_space<vmem>>, %arg7: memref<1x128xf32, #tpu.memory_space<vmem>>, %arg8: memref<1x128xf32, #tpu.memory_space<vmem>>, %arg9: memref<16x128xf32, #tpu.memory_space<vmem>>, %arg10: memref<16x128xf32, #tpu.memory_space<vmem>>) attributes {dimension_semantics = [#tpu.dimension_semantics<parallel>, #tpu.dimension_semantics<arbitrary>], iteration_bounds = array<i64: 1, 1>, scalar_prefetch = 0 : i64, scratch_operands = 1 : i64, tpu.core_type = #tpu.core_type<tc>, window_params = [{transform_indices = @transform_0, window_bounds = array<i64: 16, 128>}, {pipeline_mode = #tpu.pipeline_mode<synchronous>, transform_indices = @transform_1, window_bounds = array<i64: 128, 256>}, {transform_indices = @transform_2, window_bounds = array<i64: 1, 256>}, {pipeline_mode = #tpu.pipeline_mode<synchronous>, transform_indices = @transform_3, window_bounds = array<i64: 256, 128>}, {pipeline_mode = #tpu.pipeline_mode<synchronous>, transform_indices = @transform_4, window_bounds = array<i64: 1, 128>}, {pipeline_mode = #tpu.pipeline_mode<synchronous>, transform_indices = @transform_5, window_bounds = array<i64: 1, 128>}, {pipeline_mode = #tpu.pipeline_mode<synchronous>, transform_indices = @transform_6, window_bounds = array<i64: 1, 128>}, {transform_indices = @transform_7, window_bounds = array<i64: 16, 128>}]} {
    %c0_i32 = arith.constant 0 : i32
    %0 = arith.cmpi eq, %arg1, %c0_i32 : i32
    %1 = arith.extui %0 : i1 to i32
    %c0_i32_0 = arith.constant 0 : i32
    %2 = arith.cmpi ne, %1, %c0_i32_0 : i32
    scf.if %2 {
      %cst_18 = arith.constant 0.000000e+00 : f32
      %27 = vector.broadcast %cst_18 : f32 to vector<16x128xf32>
      %c0_19 = arith.constant 0 : index
      %c0_20 = arith.constant 0 : index
      %28 = vector.load %arg10[%c0_19, %c0_20] : memref<16x128xf32, #tpu.memory_space<vmem>>, vector<16x128xf32>
      tpu.vector_store %arg10[%c0_19, %c0_20], %27 {strides = array<i32>} : memref<16x128xf32, #tpu.memory_space<vmem>>, vector<16x128xf32>,
    } else {
    }
    %c0 = arith.constant 0 : index
    %c0_1 = arith.constant 0 : index
    %3 = vector.load %arg2[%c0, %c0_1] : memref<16x128xf32, #tpu.memory_space<vmem>>, vector<16x128xf32>
    %4 = arith.truncf %3 : vector<16x128xf32> to vector<16x128xbf16>
    %c0_2 = arith.constant 0 : index
    %c0_3 = arith.constant 0 : index
    %5 = vector.load %arg3[%c0_2, %c0_3] : memref<128x256xbf16, #tpu.memory_space<vmem>>, vector<128x256xbf16>
    %cst = arith.constant dense<0.000000e+00> : vector<16x256xf32>
    %6 = tpu.matmul %4, %5, %cst {dimension_numbers = #tpu.dot_dimension_numbers<[1], [0], [0], [1], [0, 0, 1, 1], [], []>} : vector<16x128xbf16>, vector<128x256xbf16>, vector<16x256xf32> -> vector<16x256xf32>
    %c0_4 = arith.constant 0 : index
    %c0_5 = arith.constant 0 : index
    %7 = vector.load %arg4[%c0_4, %c0_5] : memref<1x256xf32, #tpu.memory_space<vmem>>, vector<1x256xf32>
    %8 = vector.broadcast %7 : vector<1x256xf32> to vector<16x256xf32>
    %9 = arith.addf %6, %8 : vector<16x256xf32>
    %cst_6 = arith.constant 5.000000e-01 : f32
    %10 = vector.broadcast %cst_6 : f32 to vector<16x256xf32>
    %11 = arith.mulf %10, %9 : vector<16x256xf32>
    %cst_7 = arith.constant 0.707106769 : f32
    %12 = vector.broadcast %cst_7 : f32 to vector<16x256xf32>
    %13 = arith.mulf %9, %12 : vector<16x256xf32>
    %14 = math.erf %13 : vector<16x256xf32>
    %cst_8 = arith.constant 1.000000e+00 : f32
    %15 = vector.broadcast %cst_8 : f32 to vector<16x256xf32>
    %16 = arith.addf %15, %14 : vector<16x256xf32>
    %17 = arith.mulf %11, %16 : vector<16x256xf32>
    %c0_9 = arith.constant 0 : index
    %c0_10 = arith.constant 0 : index
    %18 = vector.load %arg10[%c0_9, %c0_10] : memref<16x128xf32, #tpu.memory_space<vmem>>, vector<16x128xf32>
    %19 = arith.truncf %17 : vector<16x256xf32> to vector<16x256xbf16>
    %c0_11 = arith.constant 0 : index
    %c0_12 = arith.constant 0 : index
    %20 = vector.load %arg5[%c0_11, %c0_12] : memref<256x128xbf16, #tpu.memory_space<vmem>>, vector<256x128xbf16>
    %cst_13 = arith.constant dense<0.000000e+00> : vector<16x128xf32>
    %21 = tpu.matmul %19, %20, %cst_13 {dimension_numbers = #tpu.dot_dimension_numbers<[1], [0], [0], [1], [0, 0, 1, 1], [], []>} : vector<16x256xbf16>, vector<256x128xbf16>, vector<16x128xf32> -> vector<16x128xf32>
    %22 = arith.addf %18, %21 : vector<16x128xf32>
    %c0_14 = arith.constant 0 : index
    %c0_15 = arith.constant 0 : index
    %23 = vector.load %arg10[%c0_14, %c0_15] : memref<16x128xf32, #tpu.memory_space<vmem>>, vector<16x128xf32>
    tpu.vector_store %arg10[%c0_14, %c0_15], %22 {strides = array<i32>} : memref<16x128xf32, #tpu.memory_space<vmem>>, vector<16x128xf32>,
    %c0_i32_16 = arith.constant 0 : i32
    %24 = arith.cmpi eq, %arg1, %c0_i32_16 : i32
    %25 = arith.extui %24 : i1 to i32
    %c0_i32_17 = arith.constant 0 : i32
    %26 = arith.cmpi ne, %25, %c0_i32_17 : i32
    scf.if %26 {
      %c0_18 = arith.constant 0 : index
      %c0_19 = arith.constant 0 : index
      %27 = vector.load %arg2[%c0_18, %c0_19] : memref<16x128xf32, #tpu.memory_space<vmem>>, vector<16x128xf32>
      %c0_20 = arith.constant 0 : index
      %c0_21 = arith.constant 0 : index
      %28 = vector.load %arg10[%c0_20, %c0_21] : memref<16x128xf32, #tpu.memory_space<vmem>>, vector<16x128xf32>
      %c0_22 = arith.constant 0 : index
      %c0_23 = arith.constant 0 : index
      %29 = vector.load %arg6[%c0_22, %c0_23] : memref<1x128xf32, #tpu.memory_space<vmem>>, vector<1x128xf32>
      %30 = vector.broadcast %29 : vector<1x128xf32> to vector<16x128xf32>
      %31 = arith.addf %28, %30 : vector<16x128xf32>
      %32 = arith.addf %31, %27 : vector<16x128xf32>
      %cst_24 = arith.constant dense<0.000000e+00> : vector<16xf32>
      %33 = vector.multi_reduction <add>, %32, %cst_24 [1] : vector<16x128xf32> to vector<16xf32>
      %34 = vector.shape_cast %33 : vector<16xf32> to vector<16x1xf32>
      %cst_25 = arith.constant 1.280000e+02 : f32
      %35 = vector.broadcast %cst_25 : f32 to vector<16x1xf32>
      %36 = arith.divf %34, %35 : vector<16x1xf32>
      %37 = vector.broadcast %36 : vector<16x1xf32> to vector<16x128xf32>
      %38 = arith.subf %32, %37 : vector<16x128xf32>
      %39 = arith.mulf %38, %38 : vector<16x128xf32>
      %cst_26 = arith.constant dense<0.000000e+00> : vector<16xf32>
      %40 = vector.multi_reduction <add>, %39, %cst_26 [1] : vector<16x128xf32> to vector<16xf32>
      %41 = vector.shape_cast %40 : vector<16xf32> to vector<16x1xf32>
      %cst_27 = arith.constant 1.280000e+02 : f32
      %42 = vector.broadcast %cst_27 : f32 to vector<16x1xf32>
      %43 = arith.divf %41, %42 : vector<16x1xf32>
      %44 = vector.broadcast %36 : vector<16x1xf32> to vector<16x128xf32>
      %45 = arith.subf %32, %44 : vector<16x128xf32>
      %cst_28 = arith.constant 9.99999974E-6 : f32
      %46 = vector.broadcast %cst_28 : f32 to vector<16x1xf32>
      %47 = arith.addf %43, %46 : vector<16x1xf32>
      %48 = math.rsqrt %47 : vector<16x1xf32>
      %49 = vector.broadcast %48 : vector<16x1xf32> to vector<16x128xf32>
      %50 = arith.mulf %45, %49 : vector<16x128xf32>
      %c0_29 = arith.constant 0 : index
      %c0_30 = arith.constant 0 : index
      %51 = vector.load %arg7[%c0_29, %c0_30] : memref<1x128xf32, #tpu.memory_space<vmem>>, vector<1x128xf32>
      %52 = vector.broadcast %51 : vector<1x128xf32> to vector<16x128xf32>
      %53 = arith.mulf %50, %52 : vector<16x128xf32>
      %c0_31 = arith.constant 0 : index
      %c0_32 = arith.constant 0 : index
      %54 = vector.load %arg8[%c0_31, %c0_32] : memref<1x128xf32, #tpu.memory_space<vmem>>, vector<1x128xf32>
      %55 = vector.broadcast %54 : vector<1x128xf32> to vector<16x128xf32>
      %56 = arith.addf %53, %55 : vector<16x128xf32>
      %c0_33 = arith.constant 0 : index
      %c0_34 = arith.constant 0 : index
      %57 = vector.load %arg9[%c0_33, %c0_34] : memref<16x128xf32, #tpu.memory_space<vmem>>, vector<16x128xf32>
      tpu.vector_store %arg9[%c0_33, %c0_34], %56 {strides = array<i32>} : memref<16x128xf32, #tpu.memory_space<vmem>>, vector<16x128xf32>,
    } else {
    }
    return
  }
  func.func @transform_0(%arg0: i32, %arg1: i32) -> (i32, i32) {
    %c0_i32 = arith.constant 0 : i32
    %c0_i32_0 = arith.constant 0 : i32
    return %arg0, %c0_i32 : i32, i32
  }
  func.func @transform_1(%arg0: i32, %arg1: i32) -> (i32, i32) {
    %c0_i32 = arith.constant 0 : i32
    %c0_i32_0 = arith.constant 0 : i32
    return %c0_i32, %arg1 : i32, i32
  }
  func.func @transform_2(%arg0: i32, %arg1: i32) -> (i32, i32) {
    %c0_i32 = arith.constant 0 : i32
    %c0_i32_0 = arith.constant 0 : i32
    return %c0_i32, %arg1 : i32, i32
  }
  func.func @transform_3(%arg0: i32, %arg1: i32) -> (i32, i32) {
    %c0_i32 = arith.constant 0 : i32
    %c0_i32_0 = arith.constant 0 : i32
    return %arg1, %c0_i32 : i32, i32
  }
  func.func @transform_4(%arg0: i32, %arg1: i32) -> (i32, i32) {
    %c0_i32 = arith.constant 0 : i32
    %c0_i32_0 = arith.constant 0 : i32
    %c0_i32_1 = arith.constant 0 : i32
    return %c0_i32, %c0_i32_0 : i32, i32
  }
  func.func @transform_5(%arg0: i32, %arg1: i32) -> (i32, i32) {
    %c0_i32 = arith.constant 0 : i32
    %c0_i32_0 = arith.constant 0 : i32
    %c0_i32_1 = arith.constant 0 : i32
    return %c0_i32, %c0_i32_0 : i32, i32
  }
  func.func @transform_6(%arg0: i32, %arg1: i32) -> (i32, i32) {
    %c0_i32 = arith.constant 0 : i32
    %c0_i32_0 = arith.constant 0 : i32
    %c0_i32_1 = arith.constant 0 : i32
    return %c0_i32, %c0_i32_0 : i32, i32
  }
  func.func @transform_7(%arg0: i32, %arg1: i32) -> (i32, i32) {
    %c0_i32 = arith.constant 0 : i32
    %c0_i32_0 = arith.constant 0 : i32
    return %arg0, %c0_i32 : i32, i32
  }
}

</mosaic_0001>

<llo_original>
// kernel: tpu_custom_call.1
$region0: #{tpu_custom_call.1}
  #allocation0 [shape = 'u32[]', space=smem, size = 0x4, offset = 0x4, fixed_abs, tag = 'smem constant byte address 0x4 - core index']
  #allocation1 [shape = 'u32[144,128]{1,0:T(1,128)}', space=vmem, size = 0x12000, scoped, tag = 'internal scratch']
  #allocation2 [shape = 'f32[16,128]{1,0:T(8,128)}', space=vmem, size = 0x2000, scoped, tag = 'scratch operand']
  %s0 = inlined_call_operand.hbm [shape: f32[16,128], index: 0, kind: input, shape index: {}]
  %s1 = inlined_call_operand.hbm [shape: bf16[128,256], index: 1, kind: input, shape index: {}]
  %s2 = inlined_call_operand.vmem [shape: f32[1,256], index: 2, kind: input, shape index: {}]
  %s3 = inlined_call_operand.hbm [shape: bf16[256,128], index: 3, kind: input, shape index: {}]
  %s4 = inlined_call_operand.vmem [shape: f32[1,128], index: 4, kind: input, shape index: {}]
  %s5 = inlined_call_operand.vmem [shape: f32[1,128], index: 5, kind: input, shape index: {}]
  %s6 = inlined_call_operand.vmem [shape: f32[1,128], index: 6, kind: input, shape index: {}]
  %s7 = inlined_call_operand.hbm [shape: f32[16,128], index: 7, kind: output, shape index: {}]
  %s8 = sld [smem:[#allocation0]]
  $region58: #{tpu_custom_call.1} parent=0
    _
  %s10 = ssub.s32 1, %s8
  %s11 = scalar_select 0, %s10, %s8
  $region1: #{tpu_custom_call.1} parent=0
    #allocation3 [shape = 'u8[8192]{0}', space=vmem, size = 0x2000, scoped, tag = 'input window, operand 0, single buffered']
    #allocation4 [shape = 's32[1]{0}', space=sflag, size = 0x4, scoped, tag = 'scoped memory for tpu_custom_call.1']
    #allocation5 [shape = 's32[1]{0}', space=sflag, size = 0x4, scoped, tag = 'scoped memory for tpu_custom_call.1']
    #allocation6 [shape = 'u8[65536]{0}', space=vmem, size = 0x10000, scoped, tag = 'input window, operand 1, single buffered']
    #allocation7 [shape = 's32[1]{0}', space=sflag, size = 0x4, scoped, tag = 'scoped memory for tpu_custom_call.1']
    #allocation8 [shape = 'u8[65536]{0}', space=vmem, size = 0x10000, scoped, tag = 'input window, operand 3, single buffered']
    #allocation9 [shape = 'u8[8192]{0}', space=vmem, size = 0x2000, scoped, tag = 'output window, operand 0, single buffered']
    %12 = vsyncpa [#allocation4], 0
    %13 = vsyncpa [#allocation7], 0
    %14 = vsyncpa [#allocation5], 0
    // Predicated region
    $region2: #{tpu_custom_call.1} parent=1 // pred_check
      _
    $region3: #{tpu_custom_call.1} parent=1 // pred_check_branch
      %16 = sbr.rel (0) target = $region5
    $region4: #{tpu_custom_call.1} parent=1 // pred_region
      %s18 = ssub.s32 256, 256
      %19 = vsyncadd [#allocation4], %s18
      %s20 = sshll.u32 [#allocation3], 4
      %s21 = int_to_ptr.vmem [resolvable:$true] %s20
      %26 = dma.hbm_to_vmem [thread:$0]  %s0, 256, %s21, [#allocation4], 128, 128, 8
    $region5: #{tpu_custom_call.1} parent=1 // pred_fallthru
      _
    // Predicated region
    $region6: #{tpu_custom_call.1} parent=1 // pred_check
      _
    $region7: #{tpu_custom_call.1} parent=1 // pred_check_branch
      %28 = sbr.rel (0) target = $region9
    $region8: #{tpu_custom_call.1} parent=1 // pred_region
      %s30 = ssub.s32 2048, 2048
      %31 = vsyncadd [#allocation7], %s30
      %s32 = sshll.u32 [#allocation6], 4
      %s33 = int_to_ptr.vmem [resolvable:$true] %s32
      %38 = dma.hbm_to_vmem [thread:$0]  %s1, 2048, %s33, [#allocation7], 128, 128, 8
    $region9: #{tpu_custom_call.1} parent=1 // pred_fallthru
      _
    // Predicated region
    $region10: #{tpu_custom_call.1} parent=1 // pred_check
      _
    $region11: #{tpu_custom_call.1} parent=1 // pred_check_branch
      %40 = sbr.rel (0) target = $region13
    $region12: #{tpu_custom_call.1} parent=1 // pred_region
      _
    $region13: #{tpu_custom_call.1} parent=1 // pred_fallthru
      _
    // Predicated region
    $region14: #{tpu_custom_call.1} parent=1 // pred_check
      _
    $region15: #{tpu_custom_call.1} parent=1 // pred_check_branch
      %42 = sbr.rel (0) target = $region17
    $region16: #{tpu_custom_call.1} parent=1 // pred_region
      %s44 = ssub.s32 2048, 2048
      %45 = vsyncadd [#allocation7], %s44
      %s46 = sshll.u32 [#allocation8], 4
      %s47 = int_to_ptr.vmem [resolvable:$true] %s46
      %52 = dma.hbm_to_vmem [thread:$0]  %s3, 2048, %s47, [#allocation7], 64, 64, 4
    $region17: #{tpu_custom_call.1} parent=1 // pred_fallthru
      _
    // Predicated region
    $region18: #{tpu_custom_call.1} parent=1 // pred_check
      _
    $region19: #{tpu_custom_call.1} parent=1 // pred_check_branch
      %54 = sbr.rel (0) target = $region21
    $region20: #{tpu_custom_call.1} parent=1 // pred_region
      _
    $region21: #{tpu_custom_call.1} parent=1 // pred_fallthru
      _
    // Predicated region
    $region22: #{tpu_custom_call.1} parent=1 // pred_check
      _
    $region23: #{tpu_custom_call.1} parent=1 // pred_check_branch
      %56 = sbr.rel (0) target = $region25
    $region24: #{tpu_custom_call.1} parent=1 // pred_region
      _
    $region25: #{tpu_custom_call.1} parent=1 // pred_fallthru
      _
    // Predicated region
    $region26: #{tpu_custom_call.1} parent=1 // pred_check
      _
    $region27: #{tpu_custom_call.1} parent=1 // pred_check_branch
      %58 = sbr.rel (0) target = $region29
    $region28: #{tpu_custom_call.1} parent=1 // pred_region
      _
    $region29: #{tpu_custom_call.1} parent=1 // pred_fallthru
      _
    // Predicated region
    $region30: #{tpu_custom_call.1} parent=1 // pred_check
      _
    $region31: #{tpu_custom_call.1} parent=1 // pred_check_branch
      %60 = sbr.rel (0) target = $region33
    $region32: #{tpu_custom_call.1} parent=1 // pred_region
      %61 = dma.done [#allocation4], 256
    $region33: #{tpu_custom_call.1} parent=1 // pred_fallthru
      _
    // Predicated region
    $region34: #{tpu_custom_call.1} parent=1 // pred_check
      _
    $region35: #{tpu_custom_call.1} parent=1 // pred_check_branch
      %63 = sbr.rel (0) target = $region37
    $region36: #{tpu_custom_call.1} parent=1 // pred_region
      %64 = dma.done [#allocation7], 2048
    $region37: #{tpu_custom_call.1} parent=1 // pred_fallthru
      _
    // Predicated region
    $region38: #{tpu_custom_call.1} parent=1 // pred_check
      _
    $region39: #{tpu_custom_call.1} parent=1 // pred_check_branch
      %66 = sbr.rel (0) target = $region41
    $region40: #{tpu_custom_call.1} parent=1 // pred_region
      %67 = dma.done [#allocation7], 2048
    $region41: #{tpu_custom_call.1} parent=1 // pred_fallthru
      _
    %p69 = scmp.eq.s32.totalorder 0, 0
    // Predicated region
    $region42: #{tpu_custom_call.1} parent=1 // pred_check
      %p70 = pneg %p69
    $region43: #{tpu_custom_call.1} parent=1 // pred_check_branch
      %72 = sbr.rel (%p70) target = $region45
    $region44: #{tpu_custom_call.1} parent=1 // pred_region
      %73 = vst [vmem:[#allocation2] sm:$0xff] 0.0
      %74 = vst [vmem:[#allocation2 + $0x8] sm:$0xff] 0.0
    $region45: #{tpu_custom_call.1} parent=1 // pred_fallthru
      _
    %v75 = vld [vmem:[#allocation3] sm:$0xff]
    %v76 = vld [vmem:[#allocation3 + $0x8] sm:$0xff]
    %v77 = vpack.c.bf16 %v76, %v75
    %v78 = vld [vmem:[#allocation6] sm:$0xff]
    %v79 = vld [vmem:[#allocation6 + $0x8] sm:$0xff]
    %v80 = vld [vmem:[#allocation6 + $0x10] sm:$0xff]
    %v81 = vld [vmem:[#allocation6 + $0x18] sm:$0xff]
    %v82 = vld [vmem:[#allocation6 + $0x20] sm:$0xff]
    %v83 = vld [vmem:[#allocation6 + $0x28] sm:$0xff]
    %v84 = vld [vmem:[#allocation6 + $0x30] sm:$0xff]
    %v85 = vld [vmem:[#allocation6 + $0x38] sm:$0xff]
    %v86 = vld [vmem:[#allocation6 + $0x40] sm:$0xff]
    %v87 = vld [vmem:[#allocation6 + $0x48] sm:$0xff]
    %v88 = vld [vmem:[#allocation6 + $0x50] sm:$0xff]
    %v89 = vld [vmem:[#allocation6 + $0x58] sm:$0xff]
    %v90 = vld [vmem:[#allocation6 + $0x60] sm:$0xff]
    %v91 = vld [vmem:[#allocation6 + $0x68] sm:$0xff]
    %v92 = vld [vmem:[#allocation6 + $0x70] sm:$0xff]
    %v93 = vld [vmem:[#allocation6 + $0x78] sm:$0xff]
    %v94 = vld [vmem:[%s2] sm:$0x3]
    %v96 = vlaneseq
    %v97 = vshrl.u32 %v96, 7
    %v98 = vsub.s32 0, %v97
    %v99 = vrot.slane %v94, %v98
    %v100 = vlaneseq
    %v101 = vshrl.u32 %v100, 7
    %v102 = vsub.s32 1, %v101
    %v103 = vrot.slane %v94, %v102
    %v122 = vunpack.c.l.b16 %v78
    %v123 = vunpack.c.h.b16 %v78
    %v124 = vunpack.c.l.b16 %v79
    %v125 = vunpack.c.h.b16 %v79
    %v126 = vunpack.c.l.b16 %v80
    %v127 = vunpack.c.h.b16 %v80
    %v128 = vunpack.c.l.b16 %v81
    %v129 = vunpack.c.h.b16 %v81
    %v130 = vunpack.c.l.b16 %v82
    %v131 = vunpack.c.h.b16 %v82
    %v132 = vunpack.c.l.b16 %v83
    %v133 = vunpack.c.h.b16 %v83
    %v134 = vunpack.c.l.b16 %v84
    %v135 = vunpack.c.h.b16 %v84
    %v136 = vunpack.c.l.b16 %v85
    %v137 = vunpack.c.h.b16 %v85
    %v138 = vunpack.c.l.b16 %v86
    %v139 = vunpack.c.h.b16 %v86
    %v140 = vunpack.c.l.b16 %v87
    %v141 = vunpack.c.h.b16 %v87
    %v142 = vunpack.c.l.b16 %v88
    %v143 = vunpack.c.h.b16 %v88
    %v144 = vunpack.c.l.b16 %v89
    %v145 = vunpack.c.h.b16 %v89
    %v146 = vunpack.c.l.b16 %v90
    %v147 = vunpack.c.h.b16 %v90
    %v148 = vunpack.c.l.b16 %v91
    %v149 = vunpack.c.h.b16 %v91
    %v150 = vunpack.c.l.b16 %v92
    %v151 = vunpack.c.h.b16 %v92
    %v152 = vunpack.c.l.b16 %v93
    %v153 = vunpack.c.h.b16 %v93
    %v154 = vpack.c.b16 %v124, %v122
    %v155 = vpack.c.b16 %v125, %v123
    %v156 = vpack.c.b16 %v128, %v126
    %v157 = vpack.c.b16 %v129, %v127
    %v158 = vpack.c.b16 %v132, %v130
    %v159 = vpack.c.b16 %v133, %v131
    %v160 = vpack.c.b16 %v136, %v134
    %v161 = vpack.c.b16 %v137, %v135
    %v162 = vpack.c.b16 %v140, %v138
    %v163 = vpack.c.b16 %v141, %v139
    %v164 = vpack.c.b16 %v144, %v142
    %v165 = vpack.c.b16 %v145, %v143
    %v166 = vpack.c.b16 %v148, %v146
    %v167 = vpack.c.b16 %v149, %v147
    %v168 = vpack.c.b16 %v152, %v150
    %v169 = vpack.c.b16 %v153, %v151
    %186 = vmatprep.subr.bf16.mxu0 %v155
    %187 = vmatpush1.bf16.msra.mxu0 %v154
    %188 = vmatprep.subr.bf16.mxu0 %v157
    %189 = vmatpush1.bf16.msra.mxu0 %v156
    %190 = vmatprep.subr.bf16.mxu0 %v159
    %191 = vmatpush1.bf16.msra.mxu0 %v158
    %192 = vmatprep.subr.bf16.mxu0 %v161
    %193 = vmatpush1.bf16.msra.mxu0 %v160
    %194 = vmatprep.subr.bf16.mxu0 %v163
    %195 = vmatpush1.bf16.msra.mxu0 %v162
    %196 = vmatprep.subr.bf16.mxu0 %v165
    %197 = vmatpush1.bf16.msra.mxu0 %v164
    %198 = vmatprep.subr.bf16.mxu0 %v167
    %199 = vmatpush1.bf16.msra.mxu0 %v166
    %200 = vmatprep.subr.bf16.mxu0 %v169
    %201 = vmatpush1.bf16.msra.mxu0 %v168
    %202 = vmatprep.subr.bf16.mxu0 0
    %203 = vmatpush1.bf16.msra.mxu0 0
    %204 = vmatprep.subr.bf16.mxu0 0
    %205 = vmatpush1.bf16.msra.mxu0 0
    %206 = vmatprep.subr.bf16.mxu0 0
    %207 = vmatpush1.bf16.msra.mxu0 0
    %208 = vmatprep.subr.bf16.mxu0 0
    %209 = vmatpush1.bf16.msra.mxu0 0
    %210 = vmatprep.subr.bf16.mxu0 0
    %211 = vmatpush1.bf16.msra.mxu0 0
    %212 = vmatprep.subr.bf16.mxu0 0
    %213 = vmatpush1.bf16.msra.mxu0 0
    %214 = vmatprep.subr.bf16.mxu0 0
    %215 = vmatpush1.bf16.msra.mxu0 0
    %216 = vmatprep.subr.bf16.mxu0 0
    %217 = vmatpush1.bf16.msra.mxu0 0
    %218 = vmatprep.mubr.bf16.mxu0 0
    %219 = vmatmul.mubr.bf16.gmra.mrb[0].mxu0 %v77
    %v220 = vpop.f32.mrb[0].mxu0
    %v221 = vadd.f32 %v99, %v220
    %v222 = vpop.f32.mrb[0].mxu0
    %v223 = vadd.f32 %v103, %v222
    %v224 = vpop.f32.mrb[0].mxu0
    %v225 = vadd.f32 %v99, %v224
    %v226 = vpop.f32.mrb[0].mxu0
    %v227 = vadd.f32 %v103, %v226
    %228 = vdwg.mxu0
    %v229 = vmul.f32 %v221, 0.5
    %v230 = vmul.f32 %v223, 0.5
    %v231 = vmul.f32 %v225, 0.5
    %v232 = vmul.f32 %v227, 0.5
    %v233 = vmul.f32 %v221, 0.70710677
    %v234 = vmul.f32 %v223, 0.70710677
    %v235 = vmul.f32 %v225, 0.70710677
    %v236 = vmul.f32 %v227, 0.70710677
    %v237 = verf.f32.pop %v233
    %v238 = verf.f32.pop %v234
    %v239 = verf.f32.pop %v235
    %v240 = verf.f32.pop %v236
    %v241 = vadd.f32 %v237, 1.0
    %v242 = vadd.f32 %v238, 1.0
    %v243 = vadd.f32 %v239, 1.0
    %v244 = vadd.f32 %v240, 1.0
    %v245 = vmul.f32 %v229, %v241
    %v246 = vmul.f32 %v230, %v242
    %v247 = vmul.f32 %v231, %v243
    %v248 = vmul.f32 %v232, %v244
    %v249 = vld [vmem:[#allocation2] sm:$0xff]
    %v250 = vld [vmem:[#allocation2 + $0x8] sm:$0xff]
    %v251 = vpack.c.bf16 %v247, %v245
    %v252 = vpack.c.bf16 %v248, %v246
    %v253 = vld [vmem:[#allocation8] sm:$0xf]
    %v254 = vld [vmem:[#allocation8 + $0x4] sm:$0xf]
    %v255 = vld [vmem:[#allocation8 + $0x8] sm:$0xf]
    %v256 = vld [vmem:[#allocation8 + $0xc] sm:$0xf]
    %v257 = vld [vmem:[#allocation8 + $0x10] sm:$0xf]
    %v258 = vld [vmem:[#allocation8 + $0x14] sm:$0xf]
    %v259 = vld [vmem:[#allocation8 + $0x18] sm:$0xf]
    %v260 = vld [vmem:[#allocation8 + $0x1c] sm:$0xf]
    %v261 = vld [vmem:[#allocation8 + $0x20] sm:$0xf]
    %v262 = vld [vmem:[#allocation8 + $0x24] sm:$0xf]
    %v263 = vld [vmem:[#allocation8 + $0x28] sm:$0xf]
    %v264 = vld [vmem:[#allocation8 + $0x2c] sm:$0xf]
    %v265 = vld [vmem:[#allocation8 + $0x30] sm:$0xf]
    %v266 = vld [vmem:[#allocation8 + $0x34] sm:$0xf]
    %v267 = vld [vmem:[#allocation8 + $0x38] sm:$0xf]
    %v268 = vld [vmem:[#allocation8 + $0x3c] sm:$0xf]
    %v269 = vld [vmem:[#allocation8 + $0x40] sm:$0xf]
    %v270 = vld [vmem:[#allocation8 + $0x44] sm:$0xf]
    %v271 = vld [vmem:[#allocation8 + $0x48] sm:$0xf]
    %v272 = vld [vmem:[#allocation8 + $0x4c] sm:$0xf]
    %v273 = vld [vmem:[#allocation8 + $0x50] sm:$0xf]
    %v274 = vld [vmem:[#allocation8 + $0x54] sm:$0xf]
    %v275 = vld [vmem:[#allocation8 + $0x58] sm:$0xf]
    %v276 = vld [vmem:[#allocation8 + $0x5c] sm:$0xf]
    %v277 = vld [vmem:[#allocation8 + $0x60] sm:$0xf]
    %v278 = vld [vmem:[#allocation8 + $0x64] sm:$0xf]
    %v279 = vld [vmem:[#allocation8 + $0x68] sm:$0xf]
    %v280 = vld [vmem:[#allocation8 + $0x6c] sm:$0xf]
    %v281 = vld [vmem:[#allocation8 + $0x70] sm:$0xf]
    %v282 = vld [vmem:[#allocation8 + $0x74] sm:$0xf]
    %v283 = vld [vmem:[#allocation8 + $0x78] sm:$0xf]
    %v284 = vld [vmem:[#allocation8 + $0x7c] sm:$0xf]
    %v317 = vunpack.c.l.b16 %v253
    %v318 = vunpack.c.l.b16 %v254
    %v319 = vunpack.c.l.b16 %v255
    %v320 = vunpack.c.l.b16 %v256
    %v321 = vunpack.c.l.b16 %v257
    %v322 = vunpack.c.l.b16 %v258
    %v323 = vunpack.c.l.b16 %v259
    %v324 = vunpack.c.l.b16 %v260
    %v325 = vunpack.c.l.b16 %v261
    %v326 = vunpack.c.l.b16 %v262
    %v327 = vunpack.c.l.b16 %v263
    %v328 = vunpack.c.l.b16 %v264
    %v329 = vunpack.c.l.b16 %v265
    %v330 = vunpack.c.l.b16 %v266
    %v331 = vunpack.c.l.b16 %v267
    %v332 = vunpack.c.l.b16 %v268
    %v333 = vunpack.c.l.b16 %v269
    %v334 = vunpack.c.l.b16 %v270
    %v335 = vunpack.c.l.b16 %v271
    %v336 = vunpack.c.l.b16 %v272
    %v337 = vunpack.c.l.b16 %v273
    %v338 = vunpack.c.l.b16 %v274
    %v339 = vunpack.c.l.b16 %v275
    %v340 = vunpack.c.l.b16 %v276
    %v341 = vunpack.c.l.b16 %v277
    %v342 = vunpack.c.l.b16 %v278
    %v343 = vunpack.c.l.b16 %v279
    %v344 = vunpack.c.l.b16 %v280
    %v345 = vunpack.c.l.b16 %v281
    %v346 = vunpack.c.l.b16 %v282
    %v347 = vunpack.c.l.b16 %v283
    %v348 = vunpack.c.l.b16 %v284
    %v349 = vpack.c.b16 %v318, %v317
    %v350 = vpack.c.b16 %v320, %v319
    %v351 = vpack.c.b16 %v322, %v321
    %v352 = vpack.c.b16 %v324, %v323
    %v353 = vpack.c.b16 %v326, %v325
    %v354 = vpack.c.b16 %v328, %v327
    %v355 = vpack.c.b16 %v330, %v329
    %v356 = vpack.c.b16 %v332, %v331
    %v357 = vpack.c.b16 %v334, %v333
    %v358 = vpack.c.b16 %v336, %v335
    %v359 = vpack.c.b16 %v338, %v337
    %v360 = vpack.c.b16 %v340, %v339
    %v361 = vpack.c.b16 %v342, %v341
    %v362 = vpack.c.b16 %v344, %v343
    %v363 = vpack.c.b16 %v346, %v345
    %v364 = vpack.c.b16 %v348, %v347
    %381 = vmatprep.subr.bf16.mxu0 0
    %382 = vmatpush1.bf16.msra.mxu0 %v349
    %383 = vmatprep.subr.bf16.mxu0 0
    %384 = vmatpush1.bf16.msra.mxu0 %v350
    %385 = vmatprep.subr.bf16.mxu0 0
    %386 = vmatpush1.bf16.msra.mxu0 %v351
    %387 = vmatprep.subr.bf16.mxu0 0
    %388 = vmatpush1.bf16.msra.mxu0 %v352
    %389 = vmatprep.subr.bf16.mxu0 0
    %390 = vmatpush1.bf16.msra.mxu0 %v353
    %391 = vmatprep.subr.bf16.mxu0 0
    %392 = vmatpush1.bf16.msra.mxu0 %v354
    %393 = vmatprep.subr.bf16.mxu0 0
    %394 = vmatpush1.bf16.msra.mxu0 %v355
    %395 = vmatprep.subr.bf16.mxu0 0
    %396 = vmatpush1.bf16.msra.mxu0 %v356
    %397 = vmatprep.subr.bf16.mxu0 0
    %398 = vmatpush1.bf16.msra.mxu0 %v357
    %399 = vmatprep.subr.bf16.mxu0 0
    %400 = vmatpush1.bf16.msra.mxu0 %v358
    %401 = vmatprep.subr.bf16.mxu0 0
    %402 = vmatpush1.bf16.msra.mxu0 %v359
    %403 = vmatprep.subr.bf16.mxu0 0
    %404 = vmatpush1.bf16.msra.mxu0 %v360
    %405 = vmatprep.subr.bf16.mxu0 0
    %406 = vmatpush1.bf16.msra.mxu0 %v361
    %407 = vmatprep.subr.bf16.mxu0 0
    %408 = vmatpush1.bf16.msra.mxu0 %v362
    %409 = vmatprep.subr.bf16.mxu0 0
    %410 = vmatpush1.bf16.msra.mxu0 %v363
    %411 = vmatprep.subr.bf16.mxu0 0
    %412 = vmatpush1.bf16.msra.mxu0 %v364
    %413 = vmatprep.mubr.bf16.mxu0 %v252
    %414 = vmatmul.mubr.bf16.gmra.mrb[0].mxu0 %v251
    %v415 = vpop.f32.mrb[0].mxu0
    %v416 = vadd.f32 0.0, %v415
    %v417 = vpop.f32.mrb[0].mxu0
    %v418 = vpop.f32.mrb[0].mxu0
    %v419 = vadd.f32 0.0, %v418
    %v420 = vpop.f32.mrb[0].mxu0
    %421 = vdwg.mxu0
    %v422 = vadd.f32 %v249, %v416
    %v423 = vadd.f32 %v250, %v419
    %424 = vst [vmem:[#allocation2] sm:$0xff] %v422
    %425 = vst [vmem:[#allocation2 + $0x8] sm:$0xff] %v423
    // Predicated region
    $region46: #{tpu_custom_call.1} parent=1 // pred_check
      %p426 = pneg %p69
    $region47: #{tpu_custom_call.1} parent=1 // pred_check_branch
      %428 = sbr.rel (%p426) target = $region49
    $region48: #{tpu_custom_call.1} parent=1 // pred_region
      %v429 = vld [vmem:[#allocation3] sm:$0xff]
      %v430 = vld [vmem:[#allocation3 + $0x8] sm:$0xff]
      %v431 = vld [vmem:[#allocation2] sm:$0xff]
      %v432 = vld [vmem:[#allocation2 + $0x8] sm:$0xff]
      %v433 = vld [vmem:[%s4] sm:$0x1]
      %v435 = vlaneseq
      %v436 = vshrl.u32 %v435, 7
      %v437 = vsub.s32 0, %v436
      %v438 = vrot.slane %v433, %v437
      %v440 = vadd.f32 %v431, %v438
      %v441 = vadd.f32 %v432, %v438
      %v442 = vadd.f32 %v440, %v429
      %v443 = vadd.f32 %v441, %v430
      %444 = vadd.xlane.f32.xlu0 %v442
      %v445 = vpop.xlane.xlu0 %444
      %446 = vadd.xlane.f32.xlu0 %v443
      %v447 = vpop.xlane.xlu0 %446
      %v448 = vrcp.pop 128.0
      %v449 = vmul.f32 %v445, %v448
      %v450 = vmul.f32 %v447, %v448
      %v451 = vsub.f32 %v442, %v449
      %v452 = vsub.f32 %v443, %v450
      %v453 = vmul.f32 %v451, %v451
      %v454 = vmul.f32 %v452, %v452
      %455 = vadd.xlane.f32.xlu0 %v453
      %v456 = vpop.xlane.xlu0 %455
      %457 = vadd.xlane.f32.xlu0 %v454
      %v458 = vpop.xlane.xlu0 %457
      %v459 = vmul.f32 %v456, %v448
      %v460 = vmul.f32 %v458, %v448
      %v461 = vadd.f32 %v459, 1e-05
      %v462 = vadd.f32 %v460, 1e-05
      %v463 = vrsqrt.pop %v461
      %v464 = vrsqrt.pop %v462
      %v465 = vmul.f32 %v451, %v463
      %v466 = vmul.f32 %v452, %v464
      %v467 = vld [vmem:[%s5] sm:$0x1]
      %v469 = vlaneseq
      %v470 = vshrl.u32 %v469, 7
      %v471 = vsub.s32 0, %v470
      %v472 = vrot.slane %v467, %v471
      %v474 = vmul.f32 %v465, %v472
      %v475 = vmul.f32 %v466, %v472
      %v476 = vld [vmem:[%s6] sm:$0x1]
      %v478 = vlaneseq
      %v479 = vshrl.u32 %v478, 7
      %v480 = vsub.s32 0, %v479
      %v481 = vrot.slane %v476, %v480
      %v483 = vadd.f32 %v474, %v481
      %v484 = vadd.f32 %v475, %v481
      %485 = vst [vmem:[#allocation9] sm:$0xff] %v483
      %486 = vst [vmem:[#allocation9 + $0x8] sm:$0xff] %v484
    $region49: #{tpu_custom_call.1} parent=1 // pred_fallthru
      _
    // Predicated region
    $region50: #{tpu_custom_call.1} parent=1 // pred_check
      _
    $region51: #{tpu_custom_call.1} parent=1 // pred_check_branch
      %488 = sbr.rel (0) target = $region53
    $region52: #{tpu_custom_call.1} parent=1 // pred_region
      %s490 = ssub.s32 256, 256
      %491 = vsyncadd [#allocation5], %s490
      %s492 = sshll.u32 [#allocation9], 4
      %s493 = int_to_ptr.vmem [resolvable:$true] %s492
      %498 = dma.vmem_to_hbm [thread:$0]  %s493, 256, %s7, [#allocation5], 128, 128, 8
    $region53: #{tpu_custom_call.1} parent=1 // pred_fallthru
      _
    // Predicated region
    $region54: #{tpu_custom_call.1} parent=1 // pred_check
      _
    $region55: #{tpu_custom_call.1} parent=1 // pred_check_branch
      %500 = sbr.rel (0) target = $region57
    $region56: #{tpu_custom_call.1} parent=1 // pred_region
      %501 = dma.done [#allocation5], 256
    $region57: #{tpu_custom_call.1} parent=1 // pred_fallthru
      _
    %502 = vsyncpa [#allocation4], 1
    %503 = vsyncpa [#allocation7], 1
    %504 = vsyncpa [#allocation5], 1

</llo_original>
